<compile_context>
chip_gen: v7x
topology: tpu7x:2x2x1
jax: 0.10.0
libtpu: 0.0.40
codegen_flags: <defaults>
</compile_context>

<pallas_src>
import jax
import jax.numpy as jnp
from jax.experimental import pallas as pl
from jax.experimental.pallas import tpu as pltpu


def _round_up(v: int, m: int) -> int:
    return ((v + m - 1) // m) * m


def _ffn_kernel(x_ref, w1_ref, b1_ref, w2_ref, b2_ref, o_ref, acc_ref):
    # x_ref: (tm, E), w1_ref: (E, th), b1_ref: (1, th),
    # w2_ref: (th, E), b2_ref: (1, E), o_ref: (tm, E), acc_ref: (tm, E) f32
    k = pl.program_id(1)

    @pl.when(k == 0)
    def _init():
        acc_ref[...] = jnp.zeros_like(acc_ref)

    # First matmul (bf16 MXU, f32 accumulate), bias + ReLU in f32.
    h = jnp.dot(x_ref[...], w1_ref[...], preferred_element_type=jnp.float32)
    h = jnp.maximum(h + b1_ref[...], 0.0)
    # Dropout == identity (eval mode).
    # Second matmul: accumulate this hidden slice's contribution.
    acc_ref[...] += jnp.dot(h.astype(w2_ref.dtype), w2_ref[...],
                            preferred_element_type=jnp.float32)

    @pl.when(k == pl.num_programs(1) - 1)
    def _finalize():
        # Second bias added exactly once, at the end of the contraction.
        o_ref[...] = (acc_ref[...] + b2_ref[...]).astype(o_ref.dtype)


def feed_forward(x, w1, b1, w2, b2, *, tm_max=512, th_max=512,
                 compute_dtype=jnp.bfloat16):
    """x: (B, S, E); w1: (E, H); b1: (H,); w2: (H, E); b2: (E,)."""
    B, S, E = x.shape
    H = w1.shape[1]
    M = B * S
    out_dtype = x.dtype

    # MXU/lane-aligned padded dims and tiles (multiples of 128).
    E_pad = _round_up(E, 128)
    tm = min(tm_max, _round_up(M, 128))
    th = min(th_max, _round_up(H, 128))
    M_pad = _round_up(M, tm)
    H_pad = _round_up(H, th)

    # Zero-padding is exact: padded H columns produce relu(0)=0 and padded
    # W2 rows/cols are 0, so padded regions contribute nothing.
    x2d = jnp.zeros((M_pad, E_pad), compute_dtype).at[:M, :E].set(
        x.reshape(M, E).astype(compute_dtype))
    w1_p = jnp.zeros((E_pad, H_pad), compute_dtype).at[:E, :H].set(
        w1.astype(compute_dtype))
    w2_p = jnp.zeros((H_pad, E_pad), compute_dtype).at[:H, :E].set(
        w2.astype(compute_dtype))
    b1_p = jnp.zeros((1, H_pad), jnp.float32).at[0, :H].set(b1.astype(jnp.float32))
    b2_p = jnp.zeros((1, E_pad), jnp.float32).at[0, :E].set(b2.astype(jnp.float32))

    grid = (M_pad // tm, H_pad // th)
    itemsize = jnp.dtype(compute_dtype).itemsize

    cost = pl.CostEstimate(
        flops=4 * M_pad * E_pad * H_pad,
        transcendentals=0,
        bytes_accessed=(M_pad * E_pad * itemsize                       # x
                        + grid[0] * (w1_p.size + w2_p.size) * itemsize # weights per M tile
                        + M_pad * E_pad * jnp.dtype(out_dtype).itemsize),
    )

    out = pl.pallas_call(
        _ffn_kernel,
        out_shape=jax.ShapeDtypeStruct((M_pad, E_pad), out_dtype),
        grid_spec=pltpu.PrefetchScalarGridSpec(
            num_scalar_prefetch=0,
            grid=grid,
            in_specs=[
                pl.BlockSpec((tm, E_pad), lambda i, k: (i, 0)),   # x tile
                pl.BlockSpec((E_pad, th), lambda i, k: (0, k)),   # W1 hidden-slice
                pl.BlockSpec((1, th),     lambda i, k: (0, k)),   # b1 hidden-slice
                pl.BlockSpec((th, E_pad), lambda i, k: (k, 0)),   # W2 hidden-slice
                pl.BlockSpec((1, E_pad),  lambda i, k: (0, 0)),   # b2
            ],
            out_specs=pl.BlockSpec((tm, E_pad), lambda i, k: (i, 0)),
            scratch_shapes=[pltpu.VMEM((tm, E_pad), jnp.float32)],
        ),
        compiler_params=pltpu.CompilerParams(
            dimension_semantics=("parallel", "arbitrary"),
            vmem_limit_bytes=48 * 1024 * 1024,
        ),
        cost_estimate=cost,
    )(x2d, w1_p, b1_p, w2_p, b2_p)

    return out[:M, :E].reshape(B, S, E)


def feed_forward_ref_f32(x, w1, b1, w2, b2):
    h = jnp.maximum(jnp.einsum("bse,eh->bsh", x, w1) + b1, 0.0)
    return jnp.einsum("bsh,he->bse", h, w2) + b2


def feed_forward_ref_bf16(x, w1, b1, w2, b2):
    # Same bf16-matmul / f32-accumulate recipe as the kernel, for a tight check.
    xc, w1c, w2c = (t.astype(jnp.bfloat16) for t in (x, w1, w2))
    h = jnp.einsum("bse,eh->bsh", xc, w1c, preferred_element_type=jnp.float32) + b1
    h = jnp.maximum(h, 0.0)
    y = jnp.einsum("bsh,he->bse", h.astype(jnp.bfloat16), w2c,
                   preferred_element_type=jnp.float32) + b2
    return y.astype(x.dtype)


if __name__ == "__main__":
    B, S, E, H = 2, 8, 32, 64  # batch, seq, emb_dim, hidden

    key = jax.random.PRNGKey(0)
    kx, kw1, kb1, kw2, kb2 = jax.random.split(key, 5)

    x = jax.random.normal(kx, (B, S, E), dtype=jnp.float32)
    # nn.Linear(emb_dim, hidden): weight (H, E) -> stored transposed as (E, H)
    bound1 = 1.0 / (E ** 0.5)
    w1 = jax.random.uniform(kw1, (E, H), minval=-bound1, maxval=bound1, dtype=jnp.float32)
    b1 = jax.random.uniform(kb1, (H,), minval=-bound1, maxval=bound1, dtype=jnp.float32)
    # nn.Linear(hidden, emb_dim): weight (E, H) -> stored transposed as (H, E)
    bound2 = 1.0 / (H ** 0.5)
    w2 = jax.random.uniform(kw2, (H, E), minval=-bound2, maxval=bound2, dtype=jnp.float32)
    b2 = jax.random.uniform(kb2, (E,), minval=-bound2, maxval=bound2, dtype=jnp.float32)

    out = jax.block_until_ready(feed_forward(x, w1, b1, w2, b2))
    ref_bf16 = jax.block_until_ready(feed_forward_ref_bf16(x, w1, b1, w2, b2))
    ref_f32 = jax.block_until_ready(feed_forward_ref_f32(x, w1, b1, w2, b2))

    assert out.shape == (B, S, E), out.shape
    # Structural check vs an identically-quantized reference (tight tolerance) ...
    err_bf16 = float(jnp.max(jnp.abs(out - ref_bf16)))
    assert err_bf16 < 2e-3, err_bf16
    # ... and a semantic check vs the full-f32 reference (bf16 matmul noise).
    err_f32 = float(jnp.max(jnp.abs(out - ref_f32)))
    assert err_f32 < 5e-2, err_f32
    print("KERNEL_OK")
</pallas_src>

<mosaic_0001>
module attributes {stable_mosaic.version = 11 : i64} {
  func.func @_ffn_kernel(%arg0: i32, %arg1: i32, %arg2: memref<128x128xbf16, #tpu.memory_space<vmem>>, %arg3: memref<128x128xbf16, #tpu.memory_space<vmem>>, %arg4: memref<1x128xf32, #tpu.memory_space<vmem>>, %arg5: memref<128x128xbf16, #tpu.memory_space<vmem>>, %arg6: memref<1x128xf32, #tpu.memory_space<vmem>>, %arg7: memref<128x128xf32, #tpu.memory_space<vmem>>, %arg8: memref<128x128xf32, #tpu.memory_space<vmem>>) attributes {dimension_semantics = [#tpu.dimension_semantics<parallel>, #tpu.dimension_semantics<arbitrary>], iteration_bounds = array<i64: 1, 1>, scalar_prefetch = 0 : i64, scratch_operands = 1 : i64, tpu.core_type = #tpu.core_type<tc>, window_params = [{transform_indices = @transform_0, window_bounds = array<i64: 128, 128>}, {transform_indices = @transform_1, window_bounds = array<i64: 128, 128>}, {transform_indices = @transform_2, window_bounds = array<i64: 1, 128>}, {transform_indices = @transform_3, window_bounds = array<i64: 128, 128>}, {pipeline_mode = #tpu.pipeline_mode<synchronous>, transform_indices = @transform_4, window_bounds = array<i64: 1, 128>}, {transform_indices = @transform_5, window_bounds = array<i64: 128, 128>}]} {
    %c0_i32 = arith.constant 0 : i32
    %0 = arith.cmpi eq, %arg1, %c0_i32 : i32
    %1 = arith.extui %0 : i1 to i32
    %c0_i32_0 = arith.constant 0 : i32
    %2 = arith.cmpi ne, %1, %c0_i32_0 : i32
    scf.if %2 {
      %cst_16 = arith.constant 0.000000e+00 : f32
      %20 = vector.broadcast %cst_16 : f32 to vector<128x128xf32>
      %c0_17 = arith.constant 0 : index
      %c0_18 = arith.constant 0 : index
      %21 = vector.load %arg8[%c0_17, %c0_18] : memref<128x128xf32, #tpu.memory_space<vmem>>, vector<128x128xf32>
      tpu.vector_store %arg8[%c0_17, %c0_18], %20 {strides = array<i32>} : memref<128x128xf32, #tpu.memory_space<vmem>>, vector<128x128xf32>,
    } else {
    }
    %c0 = arith.constant 0 : index
    %c0_1 = arith.constant 0 : index
    %3 = vector.load %arg2[%c0, %c0_1] : memref<128x128xbf16, #tpu.memory_space<vmem>>, vector<128x128xbf16>
    %c0_2 = arith.constant 0 : index
    %c0_3 = arith.constant 0 : index
    %4 = vector.load %arg3[%c0_2, %c0_3] : memref<128x128xbf16, #tpu.memory_space<vmem>>, vector<128x128xbf16>
    %cst = arith.constant dense<0.000000e+00> : vector<128x128xf32>
    %5 = tpu.matmul %3, %4, %cst {dimension_numbers = #tpu.dot_dimension_numbers<[1], [0], [0], [1], [0, 0, 1, 1], [], []>} : vector<128x128xbf16>, vector<128x128xbf16>, vector<128x128xf32> -> vector<128x128xf32>
    %c0_4 = arith.constant 0 : index
    %c0_5 = arith.constant 0 : index
    %6 = vector.load %arg4[%c0_4, %c0_5] : memref<1x128xf32, #tpu.memory_space<vmem>>, vector<1x128xf32>
    %7 = vector.broadcast %6 : vector<1x128xf32> to vector<128x128xf32>
    %8 = arith.addf %5, %7 : vector<128x128xf32>
    %cst_6 = arith.constant 0.000000e+00 : f32
    %9 = vector.broadcast %cst_6 : f32 to vector<128x128xf32>
    %10 = arith.maximumf %8, %9 : vector<128x128xf32>
    %c0_7 = arith.constant 0 : index
    %c0_8 = arith.constant 0 : index
    %11 = vector.load %arg8[%c0_7, %c0_8] : memref<128x128xf32, #tpu.memory_space<vmem>>, vector<128x128xf32>
    %12 = arith.truncf %10 : vector<128x128xf32> to vector<128x128xbf16>
    %c0_9 = arith.constant 0 : index
    %c0_10 = arith.constant 0 : index
    %13 = vector.load %arg5[%c0_9, %c0_10] : memref<128x128xbf16, #tpu.memory_space<vmem>>, vector<128x128xbf16>
    %cst_11 = arith.constant dense<0.000000e+00> : vector<128x128xf32>
    %14 = tpu.matmul %12, %13, %cst_11 {dimension_numbers = #tpu.dot_dimension_numbers<[1], [0], [0], [1], [0, 0, 1, 1], [], []>} : vector<128x128xbf16>, vector<128x128xbf16>, vector<128x128xf32> -> vector<128x128xf32>
    %15 = arith.addf %11, %14 : vector<128x128xf32>
    %c0_12 = arith.constant 0 : index
    %c0_13 = arith.constant 0 : index
    %16 = vector.load %arg8[%c0_12, %c0_13] : memref<128x128xf32, #tpu.memory_space<vmem>>, vector<128x128xf32>
    tpu.vector_store %arg8[%c0_12, %c0_13], %15 {strides = array<i32>} : memref<128x128xf32, #tpu.memory_space<vmem>>, vector<128x128xf32>,
    %c0_i32_14 = arith.constant 0 : i32
    %17 = arith.cmpi eq, %arg1, %c0_i32_14 : i32
    %18 = arith.extui %17 : i1 to i32
    %c0_i32_15 = arith.constant 0 : i32
    %19 = arith.cmpi ne, %18, %c0_i32_15 : i32
    scf.if %19 {
      %c0_16 = arith.constant 0 : index
      %c0_17 = arith.constant 0 : index
      %20 = vector.load %arg8[%c0_16, %c0_17] : memref<128x128xf32, #tpu.memory_space<vmem>>, vector<128x128xf32>
      %c0_18 = arith.constant 0 : index
      %c0_19 = arith.constant 0 : index
      %21 = vector.load %arg6[%c0_18, %c0_19] : memref<1x128xf32, #tpu.memory_space<vmem>>, vector<1x128xf32>
      %22 = vector.broadcast %21 : vector<1x128xf32> to vector<128x128xf32>
      %23 = arith.addf %20, %22 : vector<128x128xf32>
      %c0_20 = arith.constant 0 : index
      %c0_21 = arith.constant 0 : index
      %24 = vector.load %arg7[%c0_20, %c0_21] : memref<128x128xf32, #tpu.memory_space<vmem>>, vector<128x128xf32>
      tpu.vector_store %arg7[%c0_20, %c0_21], %23 {strides = array<i32>} : memref<128x128xf32, #tpu.memory_space<vmem>>, vector<128x128xf32>,
    } else {
    }
    return
  }
  func.func @transform_0(%arg0: i32, %arg1: i32) -> (i32, i32) {
    %c0_i32 = arith.constant 0 : i32
    %c0_i32_0 = arith.constant 0 : i32
    return %arg0, %c0_i32 : i32, i32
  }
  func.func @transform_1(%arg0: i32, %arg1: i32) -> (i32, i32) {
    %c0_i32 = arith.constant 0 : i32
    %c0_i32_0 = arith.constant 0 : i32
    return %c0_i32, %arg1 : i32, i32
  }
  func.func @transform_2(%arg0: i32, %arg1: i32) -> (i32, i32) {
    %c0_i32 = arith.constant 0 : i32
    %c0_i32_0 = arith.constant 0 : i32
    return %c0_i32, %arg1 : i32, i32
  }
  func.func @transform_3(%arg0: i32, %arg1: i32) -> (i32, i32) {
    %c0_i32 = arith.constant 0 : i32
    %c0_i32_0 = arith.constant 0 : i32
    return %arg1, %c0_i32 : i32, i32
  }
  func.func @transform_4(%arg0: i32, %arg1: i32) -> (i32, i32) {
    %c0_i32 = arith.constant 0 : i32
    %c0_i32_0 = arith.constant 0 : i32
    %c0_i32_1 = arith.constant 0 : i32
    return %c0_i32, %c0_i32_0 : i32, i32
  }
  func.func @transform_5(%arg0: i32, %arg1: i32) -> (i32, i32) {
    %c0_i32 = arith.constant 0 : i32
    %c0_i32_0 = arith.constant 0 : i32
    return %arg0, %c0_i32 : i32, i32
  }
}

</mosaic_0001>

<llo_original>
// kernel: tpu_custom_call.1
$region0: #{tpu_custom_call.1}
  #allocation0 [shape = 'u32[]', space=smem, size = 0x4, offset = 0x4, fixed_abs, tag = 'smem constant byte address 0x4 - core index']
  #allocation1 [shape = 'u32[144,128]{1,0:T(1,128)}', space=vmem, size = 0x12000, scoped, tag = 'internal scratch']
  #allocation2 [shape = 'f32[128,128]{1,0:T(8,128)}', space=vmem, size = 0x10000, scoped, tag = 'scratch operand']
  %s0 = inlined_call_operand.hbm [shape: bf16[128,128], index: 0, kind: input, shape index: {}]
  %s1 = inlined_call_operand.hbm [shape: bf16[128,128], index: 1, kind: input, shape index: {}]
  %s2 = inlined_call_operand.vmem [shape: f32[1,128], index: 2, kind: input, shape index: {}]
  %s3 = inlined_call_operand.hbm [shape: bf16[128,128], index: 3, kind: input, shape index: {}]
  %s4 = inlined_call_operand.vmem [shape: f32[1,128], index: 4, kind: input, shape index: {}]
  %s5 = inlined_call_operand.hbm [shape: f32[128,128], index: 5, kind: output, shape index: {}]
  %s6 = sld [smem:[#allocation0]]
  $region50: #{tpu_custom_call.1} parent=0
    _
  %s8 = ssub.s32 1, %s6
  %s9 = scalar_select 0, %s8, %s6
  $region1: #{tpu_custom_call.1} parent=0
    #allocation3 [shape = 'u8[32768]{0}', space=vmem, size = 0x8000, scoped, tag = 'input window, operand 0, single buffered']
    #allocation4 [shape = 's32[1]{0}', space=sflag, size = 0x4, scoped, tag = 'scoped memory for tpu_custom_call.1']
    #allocation5 [shape = 's32[1]{0}', space=sflag, size = 0x4, scoped, tag = 'scoped memory for tpu_custom_call.1']
    #allocation6 [shape = 'u8[32768]{0}', space=vmem, size = 0x8000, scoped, tag = 'input window, operand 1, single buffered']
    #allocation7 [shape = 's32[1]{0}', space=sflag, size = 0x4, scoped, tag = 'scoped memory for tpu_custom_call.1']
    #allocation8 [shape = 'u8[32768]{0}', space=vmem, size = 0x8000, scoped, tag = 'input window, operand 3, single buffered']
    #allocation9 [shape = 'u8[65536]{0}', space=vmem, size = 0x10000, scoped, tag = 'output window, operand 0, single buffered']
    %10 = vsyncpa [#allocation4], 0
    %11 = vsyncpa [#allocation7], 0
    %12 = vsyncpa [#allocation5], 0
    // Predicated region
    $region2: #{tpu_custom_call.1} parent=1 // pred_check
      _
    $region3: #{tpu_custom_call.1} parent=1 // pred_check_branch
      %14 = sbr.rel (0) target = $region5
    $region4: #{tpu_custom_call.1} parent=1 // pred_region
      %s16 = ssub.s32 1024, 1024
      %17 = vsyncadd [#allocation4], %s16
      %s18 = sshll.u32 [#allocation3], 4
      %s19 = int_to_ptr.vmem [resolvable:$true] %s18
      %24 = dma.hbm_to_vmem [thread:$0]  %s0, 1024, %s19, [#allocation4], 64, 64, 4
    $region5: #{tpu_custom_call.1} parent=1 // pred_fallthru
      _
    // Predicated region
    $region6: #{tpu_custom_call.1} parent=1 // pred_check
      _
    $region7: #{tpu_custom_call.1} parent=1 // pred_check_branch
      %26 = sbr.rel (0) target = $region9
    $region8: #{tpu_custom_call.1} parent=1 // pred_region
      %s28 = ssub.s32 1024, 1024
      %29 = vsyncadd [#allocation7], %s28
      %s30 = sshll.u32 [#allocation6], 4
      %s31 = int_to_ptr.vmem [resolvable:$true] %s30
      %36 = dma.hbm_to_vmem [thread:$0]  %s1, 1024, %s31, [#allocation7], 64, 64, 4
    $region9: #{tpu_custom_call.1} parent=1 // pred_fallthru
      _
    // Predicated region
    $region10: #{tpu_custom_call.1} parent=1 // pred_check
      _
    $region11: #{tpu_custom_call.1} parent=1 // pred_check_branch
      %38 = sbr.rel (0) target = $region13
    $region12: #{tpu_custom_call.1} parent=1 // pred_region
      _
    $region13: #{tpu_custom_call.1} parent=1 // pred_fallthru
      _
    // Predicated region
    $region14: #{tpu_custom_call.1} parent=1 // pred_check
      _
    $region15: #{tpu_custom_call.1} parent=1 // pred_check_branch
      %40 = sbr.rel (0) target = $region17
    $region16: #{tpu_custom_call.1} parent=1 // pred_region
      %s42 = ssub.s32 1024, 1024
      %43 = vsyncadd [#allocation7], %s42
      %s44 = sshll.u32 [#allocation8], 4
      %s45 = int_to_ptr.vmem [resolvable:$true] %s44
      %50 = dma.hbm_to_vmem [thread:$0]  %s3, 1024, %s45, [#allocation7], 64, 64, 4
    $region17: #{tpu_custom_call.1} parent=1 // pred_fallthru
      _
    // Predicated region
    $region18: #{tpu_custom_call.1} parent=1 // pred_check
      _
    $region19: #{tpu_custom_call.1} parent=1 // pred_check_branch
      %52 = sbr.rel (0) target = $region21
    $region20: #{tpu_custom_call.1} parent=1 // pred_region
      _
    $region21: #{tpu_custom_call.1} parent=1 // pred_fallthru
      _
    // Predicated region
    $region22: #{tpu_custom_call.1} parent=1 // pred_check
      _
    $region23: #{tpu_custom_call.1} parent=1 // pred_check_branch
      %54 = sbr.rel (0) target = $region25
    $region24: #{tpu_custom_call.1} parent=1 // pred_region
      %55 = dma.done [#allocation4], 1024
    $region25: #{tpu_custom_call.1} parent=1 // pred_fallthru
      _
    // Predicated region
    $region26: #{tpu_custom_call.1} parent=1 // pred_check
      _
    $region27: #{tpu_custom_call.1} parent=1 // pred_check_branch
      %57 = sbr.rel (0) target = $region29
    $region28: #{tpu_custom_call.1} parent=1 // pred_region
      %58 = dma.done [#allocation7], 1024
    $region29: #{tpu_custom_call.1} parent=1 // pred_fallthru
      _
    // Predicated region
    $region30: #{tpu_custom_call.1} parent=1 // pred_check
      _
    $region31: #{tpu_custom_call.1} parent=1 // pred_check_branch
      %60 = sbr.rel (0) target = $region33
    $region32: #{tpu_custom_call.1} parent=1 // pred_region
      %61 = dma.done [#allocation7], 1024
    $region33: #{tpu_custom_call.1} parent=1 // pred_fallthru
      _
    %p63 = scmp.eq.s32.totalorder 0, 0
    // Predicated region
    $region34: #{tpu_custom_call.1} parent=1 // pred_check
      %p64 = pneg %p63
    $region35: #{tpu_custom_call.1} parent=1 // pred_check_branch
      %66 = sbr.rel (%p64) target = $region37
    $region36: #{tpu_custom_call.1} parent=1 // pred_region
      %67 = vst [vmem:[#allocation2] sm:$0xff] 0.0
      %68 = vst [vmem:[#allocation2 + $0x8] sm:$0xff] 0.0
      %69 = vst [vmem:[#allocation2 + $0x10] sm:$0xff] 0.0
      %70 = vst [vmem:[#allocation2 + $0x18] sm:$0xff] 0.0
      %71 = vst [vmem:[#allocation2 + $0x20] sm:$0xff] 0.0
      %72 = vst [vmem:[#allocation2 + $0x28] sm:$0xff] 0.0
      %73 = vst [vmem:[#allocation2 + $0x30] sm:$0xff] 0.0
      %74 = vst [vmem:[#allocation2 + $0x38] sm:$0xff] 0.0
      %75 = vst [vmem:[#allocation2 + $0x40] sm:$0xff] 0.0
      %76 = vst [vmem:[#allocation2 + $0x48] sm:$0xff] 0.0
      %77 = vst [vmem:[#allocation2 + $0x50] sm:$0xff] 0.0
      %78 = vst [vmem:[#allocation2 + $0x58] sm:$0xff] 0.0
      %79 = vst [vmem:[#allocation2 + $0x60] sm:$0xff] 0.0
      %80 = vst [vmem:[#allocation2 + $0x68] sm:$0xff] 0.0
      %81 = vst [vmem:[#allocation2 + $0x70] sm:$0xff] 0.0
      %82 = vst [vmem:[#allocation2 + $0x78] sm:$0xff] 0.0
    $region37: #{tpu_custom_call.1} parent=1 // pred_fallthru
      _
    %v83 = vld [vmem:[#allocation3] sm:$0xf]
    %v84 = vld [vmem:[#allocation3 + $0x4] sm:$0xf]
    %v85 = vld [vmem:[#allocation3 + $0x8] sm:$0xf]
    %v86 = vld [vmem:[#allocation3 + $0xc] sm:$0xf]
    %v87 = vld [vmem:[#allocation3 + $0x10] sm:$0xf]
    %v88 = vld [vmem:[#allocation3 + $0x14] sm:$0xf]
    %v89 = vld [vmem:[#allocation3 + $0x18] sm:$0xf]
    %v90 = vld [vmem:[#allocation3 + $0x1c] sm:$0xf]
    %v91 = vld [vmem:[#allocation3 + $0x20] sm:$0xf]
    %v92 = vld [vmem:[#allocation3 + $0x24] sm:$0xf]
    %v93 = vld [vmem:[#allocation3 + $0x28] sm:$0xf]
    %v94 = vld [vmem:[#allocation3 + $0x2c] sm:$0xf]
    %v95 = vld [vmem:[#allocation3 + $0x30] sm:$0xf]
    %v96 = vld [vmem:[#allocation3 + $0x34] sm:$0xf]
    %v97 = vld [vmem:[#allocation3 + $0x38] sm:$0xf]
    %v98 = vld [vmem:[#allocation3 + $0x3c] sm:$0xf]
    %v99 = vld [vmem:[#allocation6] sm:$0xf]
    %v100 = vld [vmem:[#allocation6 + $0x4] sm:$0xf]
    %v101 = vld [vmem:[#allocation6 + $0x8] sm:$0xf]
    %v102 = vld [vmem:[#allocation6 + $0xc] sm:$0xf]
    %v103 = vld [vmem:[#allocation6 + $0x10] sm:$0xf]
    %v104 = vld [vmem:[#allocation6 + $0x14] sm:$0xf]
    %v105 = vld [vmem:[#allocation6 + $0x18] sm:$0xf]
    %v106 = vld [vmem:[#allocation6 + $0x1c] sm:$0xf]
    %v107 = vld [vmem:[#allocation6 + $0x20] sm:$0xf]
    %v108 = vld [vmem:[#allocation6 + $0x24] sm:$0xf]
    %v109 = vld [vmem:[#allocation6 + $0x28] sm:$0xf]
    %v110 = vld [vmem:[#allocation6 + $0x2c] sm:$0xf]
    %v111 = vld [vmem:[#allocation6 + $0x30] sm:$0xf]
    %v112 = vld [vmem:[#allocation6 + $0x34] sm:$0xf]
    %v113 = vld [vmem:[#allocation6 + $0x38] sm:$0xf]
    %v114 = vld [vmem:[#allocation6 + $0x3c] sm:$0xf]
    %v115 = vld [vmem:[%s2] sm:$0x1]
    %v117 = vlaneseq
    %v118 = vshrl.u32 %v117, 7
    %v119 = vsub.s32 0, %v118
    %v120 = vrot.slane %v115, %v119
    %v138 = vunpack.c.l.b16 %v83
    %v139 = vunpack.c.l.b16 %v84
    %v140 = vunpack.c.l.b16 %v85
    %v141 = vunpack.c.l.b16 %v86
    %v142 = vunpack.c.l.b16 %v87
    %v143 = vunpack.c.l.b16 %v88
    %v144 = vunpack.c.l.b16 %v89
    %v145 = vunpack.c.l.b16 %v90
    %v146 = vunpack.c.l.b16 %v91
    %v147 = vunpack.c.l.b16 %v92
    %v148 = vunpack.c.l.b16 %v93
    %v149 = vunpack.c.l.b16 %v94
    %v150 = vunpack.c.l.b16 %v95
    %v151 = vunpack.c.l.b16 %v96
    %v152 = vunpack.c.l.b16 %v97
    %v153 = vunpack.c.l.b16 %v98
    %v154 = vpack.c.b16 %v139, %v138
    %v155 = vpack.c.b16 %v141, %v140
    %v156 = vpack.c.b16 %v143, %v142
    %v157 = vpack.c.b16 %v145, %v144
    %v158 = vpack.c.b16 %v147, %v146
    %v159 = vpack.c.b16 %v149, %v148
    %v160 = vpack.c.b16 %v151, %v150
    %v161 = vpack.c.b16 %v153, %v152
    %v186 = vunpack.c.l.b16 %v99
    %v187 = vunpack.c.l.b16 %v100
    %v188 = vunpack.c.l.b16 %v101
    %v189 = vunpack.c.l.b16 %v102
    %v190 = vunpack.c.l.b16 %v103
    %v191 = vunpack.c.l.b16 %v104
    %v192 = vunpack.c.l.b16 %v105
    %v193 = vunpack.c.l.b16 %v106
    %v194 = vunpack.c.l.b16 %v107
    %v195 = vunpack.c.l.b16 %v108
    %v196 = vunpack.c.l.b16 %v109
    %v197 = vunpack.c.l.b16 %v110
    %v198 = vunpack.c.l.b16 %v111
    %v199 = vunpack.c.l.b16 %v112
    %v200 = vunpack.c.l.b16 %v113
    %v201 = vunpack.c.l.b16 %v114
    %v202 = vpack.c.b16 %v187, %v186
    %v203 = vpack.c.b16 %v189, %v188
    %v204 = vpack.c.b16 %v191, %v190
    %v205 = vpack.c.b16 %v193, %v192
    %v206 = vpack.c.b16 %v195, %v194
    %v207 = vpack.c.b16 %v197, %v196
    %v208 = vpack.c.b16 %v199, %v198
    %v209 = vpack.c.b16 %v201, %v200
    %218 = vmatprep.subr.bf16.mxu0 0
    %219 = vmatpush1.bf16.msra.mxu0 %v202
    %220 = vmatprep.subr.bf16.mxu0 0
    %221 = vmatpush1.bf16.msra.mxu0 %v203
    %222 = vmatprep.subr.bf16.mxu0 0
    %223 = vmatpush1.bf16.msra.mxu0 %v204
    %224 = vmatprep.subr.bf16.mxu0 0
    %225 = vmatpush1.bf16.msra.mxu0 %v205
    %226 = vmatprep.subr.bf16.mxu0 0
    %227 = vmatpush1.bf16.msra.mxu0 %v206
    %228 = vmatprep.subr.bf16.mxu0 0
    %229 = vmatpush1.bf16.msra.mxu0 %v207
    %230 = vmatprep.subr.bf16.mxu0 0
    %231 = vmatpush1.bf16.msra.mxu0 %v208
    %232 = vmatprep.subr.bf16.mxu0 0
    %233 = vmatpush1.bf16.msra.mxu0 %v209
    %234 = vmatprep.subr.bf16.mxu0 0
    %235 = vmatpush1.bf16.msra.mxu0 0
    %236 = vmatprep.subr.bf16.mxu0 0
    %237 = vmatpush1.bf16.msra.mxu0 0
    %238 = vmatprep.subr.bf16.mxu0 0
    %239 = vmatpush1.bf16.msra.mxu0 0
    %240 = vmatprep.subr.bf16.mxu0 0
    %241 = vmatpush1.bf16.msra.mxu0 0
    %242 = vmatprep.subr.bf16.mxu0 0
    %243 = vmatpush1.bf16.msra.mxu0 0
    %244 = vmatprep.subr.bf16.mxu0 0
    %245 = vmatpush1.bf16.msra.mxu0 0
    %246 = vmatprep.subr.bf16.mxu0 0
    %247 = vmatpush1.bf16.msra.mxu0 0
    %248 = vmatprep.subr.bf16.mxu0 0
    %249 = vmatpush1.bf16.msra.mxu0 0
    %250 = vmatprep.mubr.bf16.mxu0 0
    %251 = vmatmul.mubr.bf16.gmra.mrb[0].mxu0 %v154
    %v252 = vpop.f32.mrb[0].mxu0
    %v253 = vadd.f32 %v120, %v252
    %v254 = vpop.f32.mrb[0].mxu0
    %v255 = vpop.f32.mrb[0].mxu0
    %v256 = vadd.f32 %v120, %v255
    %v257 = vpop.f32.mrb[0].mxu0
    %258 = vmatprep.mubr.bf16.mxu0 0
    %259 = vmatmul.mubr.bf16.gmra.mrb[0].mxu0 %v155
    %v260 = vpop.f32.mrb[0].mxu0
    %v261 = vadd.f32 %v120, %v260
    %v262 = vpop.f32.mrb[0].mxu0
    %v263 = vpop.f32.mrb[0].mxu0
    %v264 = vadd.f32 %v120, %v263
    %v265 = vpop.f32.mrb[0].mxu0
    %266 = vmatprep.mubr.bf16.mxu0 0
    %267 = vmatmul.mubr.bf16.gmra.mrb[0].mxu0 %v156
    %v268 = vpop.f32.mrb[0].mxu0
    %v269 = vadd.f32 %v120, %v268
    %v270 = vpop.f32.mrb[0].mxu0
    %v271 = vpop.f32.mrb[0].mxu0
    %v272 = vadd.f32 %v120, %v271
    %v273 = vpop.f32.mrb[0].mxu0
    %274 = vmatprep.mubr.bf16.mxu0 0
    %275 = vmatmul.mubr.bf16.gmra.mrb[0].mxu0 %v157
    %v276 = vpop.f32.mrb[0].mxu0
    %v277 = vadd.f32 %v120, %v276
    %v278 = vpop.f32.mrb[0].mxu0
    %v279 = vpop.f32.mrb[0].mxu0
    %v280 = vadd.f32 %v120, %v279
    %v281 = vpop.f32.mrb[0].mxu0
    %282 = vmatprep.mubr.bf16.mxu0 0
    %283 = vmatmul.mubr.bf16.gmra.mrb[0].mxu0 %v158
    %v284 = vpop.f32.mrb[0].mxu0
    %v285 = vadd.f32 %v120, %v284
    %v286 = vpop.f32.mrb[0].mxu0
    %v287 = vpop.f32.mrb[0].mxu0
    %v288 = vadd.f32 %v120, %v287
    %v289 = vpop.f32.mrb[0].mxu0
    %290 = vmatprep.mubr.bf16.mxu0 0
    %291 = vmatmul.mubr.bf16.gmra.mrb[0].mxu0 %v159
    %v292 = vpop.f32.mrb[0].mxu0
    %v293 = vadd.f32 %v120, %v292
    %v294 = vpop.f32.mrb[0].mxu0
    %v295 = vpop.f32.mrb[0].mxu0
    %v296 = vadd.f32 %v120, %v295
    %v297 = vpop.f32.mrb[0].mxu0
    %298 = vmatprep.mubr.bf16.mxu0 0
    %299 = vmatmul.mubr.bf16.gmra.mrb[0].mxu0 %v160
    %v300 = vpop.f32.mrb[0].mxu0
    %v301 = vadd.f32 %v120, %v300
    %v302 = vpop.f32.mrb[0].mxu0
    %v303 = vpop.f32.mrb[0].mxu0
    %v304 = vadd.f32 %v120, %v303
    %v305 = vpop.f32.mrb[0].mxu0
    %306 = vmatprep.mubr.bf16.mxu0 0
    %307 = vmatmul.mubr.bf16.gmra.mrb[0].mxu0 %v161
    %v308 = vpop.f32.mrb[0].mxu0
    %v309 = vadd.f32 %v120, %v308
    %v310 = vpop.f32.mrb[0].mxu0
    %v311 = vpop.f32.mrb[0].mxu0
    %v312 = vadd.f32 %v120, %v311
    %v313 = vpop.f32.mrb[0].mxu0
    %314 = vdwg.mxu0
    %v315 = vmax.f32 %v253, 0.0
    %v316 = vmax.f32 %v256, 0.0
    %v317 = vmax.f32 %v261, 0.0
    %v318 = vmax.f32 %v264, 0.0
    %v319 = vmax.f32 %v269, 0.0
    %v320 = vmax.f32 %v272, 0.0
    %v321 = vmax.f32 %v277, 0.0
    %v322 = vmax.f32 %v280, 0.0
    %v323 = vmax.f32 %v285, 0.0
    %v324 = vmax.f32 %v288, 0.0
    %v325 = vmax.f32 %v293, 0.0
    %v326 = vmax.f32 %v296, 0.0
    %v327 = vmax.f32 %v301, 0.0
    %v328 = vmax.f32 %v304, 0.0
    %v329 = vmax.f32 %v309, 0.0
    %v330 = vmax.f32 %v312, 0.0
    %v331 = vld [vmem:[#allocation2] sm:$0xff]
    %v332 = vld [vmem:[#allocation2 + $0x8] sm:$0xff]
    %v333 = vld [vmem:[#allocation2 + $0x10] sm:$0xff]
    %v334 = vld [vmem:[#allocation2 + $0x18] sm:$0xff]
    %v335 = vld [vmem:[#allocation2 + $0x20] sm:$0xff]
    %v336 = vld [vmem:[#allocation2 + $0x28] sm:$0xff]
    %v337 = vld [vmem:[#allocation2 + $0x30] sm:$0xff]
    %v338 = vld [vmem:[#allocation2 + $0x38] sm:$0xff]
    %v339 = vld [vmem:[#allocation2 + $0x40] sm:$0xff]
    %v340 = vld [vmem:[#allocation2 + $0x48] sm:$0xff]
    %v341 = vld [vmem:[#allocation2 + $0x50] sm:$0xff]
    %v342 = vld [vmem:[#allocation2 + $0x58] sm:$0xff]
    %v343 = vld [vmem:[#allocation2 + $0x60] sm:$0xff]
    %v344 = vld [vmem:[#allocation2 + $0x68] sm:$0xff]
    %v345 = vld [vmem:[#allocation2 + $0x70] sm:$0xff]
    %v346 = vld [vmem:[#allocation2 + $0x78] sm:$0xff]
    %v347 = vpack.c.bf16 %v316, %v315
    %v348 = vpack.c.bf16 %v318, %v317
    %v349 = vpack.c.bf16 %v320, %v319
    %v350 = vpack.c.bf16 %v322, %v321
    %v351 = vpack.c.bf16 %v324, %v323
    %v352 = vpack.c.bf16 %v326, %v325
    %v353 = vpack.c.bf16 %v328, %v327
    %v354 = vpack.c.bf16 %v330, %v329
    %v355 = vld [vmem:[#allocation8] sm:$0xf]
    %v356 = vld [vmem:[#allocation8 + $0x4] sm:$0xf]
    %v357 = vld [vmem:[#allocation8 + $0x8] sm:$0xf]
    %v358 = vld [vmem:[#allocation8 + $0xc] sm:$0xf]
    %v359 = vld [vmem:[#allocation8 + $0x10] sm:$0xf]
    %v360 = vld [vmem:[#allocation8 + $0x14] sm:$0xf]
    %v361 = vld [vmem:[#allocation8 + $0x18] sm:$0xf]
    %v362 = vld [vmem:[#allocation8 + $0x1c] sm:$0xf]
    %v363 = vld [vmem:[#allocation8 + $0x20] sm:$0xf]
    %v364 = vld [vmem:[#allocation8 + $0x24] sm:$0xf]
    %v365 = vld [vmem:[#allocation8 + $0x28] sm:$0xf]
    %v366 = vld [vmem:[#allocation8 + $0x2c] sm:$0xf]
    %v367 = vld [vmem:[#allocation8 + $0x30] sm:$0xf]
    %v368 = vld [vmem:[#allocation8 + $0x34] sm:$0xf]
    %v369 = vld [vmem:[#allocation8 + $0x38] sm:$0xf]
    %v370 = vld [vmem:[#allocation8 + $0x3c] sm:$0xf]
    %v387 = vunpack.c.l.b16 %v355
    %v388 = vunpack.c.l.b16 %v356
    %v389 = vunpack.c.l.b16 %v357
    %v390 = vunpack.c.l.b16 %v358
    %v391 = vunpack.c.l.b16 %v359
    %v392 = vunpack.c.l.b16 %v360
    %v393 = vunpack.c.l.b16 %v361
    %v394 = vunpack.c.l.b16 %v362
    %v395 = vunpack.c.l.b16 %v363
    %v396 = vunpack.c.l.b16 %v364
    %v397 = vunpack.c.l.b16 %v365
    %v398 = vunpack.c.l.b16 %v366
    %v399 = vunpack.c.l.b16 %v367
    %v400 = vunpack.c.l.b16 %v368
    %v401 = vunpack.c.l.b16 %v369
    %v402 = vunpack.c.l.b16 %v370
    %v403 = vpack.c.b16 %v388, %v387
    %v404 = vpack.c.b16 %v390, %v389
    %v405 = vpack.c.b16 %v392, %v391
    %v406 = vpack.c.b16 %v394, %v393
    %v407 = vpack.c.b16 %v396, %v395
    %v408 = vpack.c.b16 %v398, %v397
    %v409 = vpack.c.b16 %v400, %v399
    %v410 = vpack.c.b16 %v402, %v401
    %419 = vmatprep.subr.bf16.mxu0 0
    %420 = vmatpush1.bf16.msra.mxu0 %v403
    %421 = vmatprep.subr.bf16.mxu0 0
    %422 = vmatpush1.bf16.msra.mxu0 %v404
    %423 = vmatprep.subr.bf16.mxu0 0
    %424 = vmatpush1.bf16.msra.mxu0 %v405
    %425 = vmatprep.subr.bf16.mxu0 0
    %426 = vmatpush1.bf16.msra.mxu0 %v406
    %427 = vmatprep.subr.bf16.mxu0 0
    %428 = vmatpush1.bf16.msra.mxu0 %v407
    %429 = vmatprep.subr.bf16.mxu0 0
    %430 = vmatpush1.bf16.msra.mxu0 %v408
    %431 = vmatprep.subr.bf16.mxu0 0
    %432 = vmatpush1.bf16.msra.mxu0 %v409
    %433 = vmatprep.subr.bf16.mxu0 0
    %434 = vmatpush1.bf16.msra.mxu0 %v410
    %435 = vmatprep.subr.bf16.mxu0 0
    %436 = vmatpush1.bf16.msra.mxu0 0
    %437 = vmatprep.subr.bf16.mxu0 0
    %438 = vmatpush1.bf16.msra.mxu0 0
    %439 = vmatprep.subr.bf16.mxu0 0
    %440 = vmatpush1.bf16.msra.mxu0 0
    %441 = vmatprep.subr.bf16.mxu0 0
    %442 = vmatpush1.bf16.msra.mxu0 0
    %443 = vmatprep.subr.bf16.mxu0 0
    %444 = vmatpush1.bf16.msra.mxu0 0
    %445 = vmatprep.subr.bf16.mxu0 0
    %446 = vmatpush1.bf16.msra.mxu0 0
    %447 = vmatprep.subr.bf16.mxu0 0
    %448 = vmatpush1.bf16.msra.mxu0 0
    %449 = vmatprep.subr.bf16.mxu0 0
    %450 = vmatpush1.bf16.msra.mxu0 0
    %451 = vmatprep.mubr.bf16.mxu0 0
    %452 = vmatmul.mubr.bf16.gmra.mrb[0].mxu0 %v347
    %v453 = vpop.f32.mrb[0].mxu0
    %v454 = vadd.f32 0.0, %v453
    %v455 = vpop.f32.mrb[0].mxu0
    %v456 = vpop.f32.mrb[0].mxu0
    %v457 = vadd.f32 0.0, %v456
    %v458 = vpop.f32.mrb[0].mxu0
    %459 = vmatprep.mubr.bf16.mxu0 0
    %460 = vmatmul.mubr.bf16.gmra.mrb[0].mxu0 %v348
    %v461 = vpop.f32.mrb[0].mxu0
    %v462 = vadd.f32 0.0, %v461
    %v463 = vpop.f32.mrb[0].mxu0
    %v464 = vpop.f32.mrb[0].mxu0
    %v465 = vadd.f32 0.0, %v464
    %v466 = vpop.f32.mrb[0].mxu0
    %467 = vmatprep.mubr.bf16.mxu0 0
    %468 = vmatmul.mubr.bf16.gmra.mrb[0].mxu0 %v349
    %v469 = vpop.f32.mrb[0].mxu0
    %v470 = vadd.f32 0.0, %v469
    %v471 = vpop.f32.mrb[0].mxu0
    %v472 = vpop.f32.mrb[0].mxu0
    %v473 = vadd.f32 0.0, %v472
    %v474 = vpop.f32.mrb[0].mxu0
    %475 = vmatprep.mubr.bf16.mxu0 0
    %476 = vmatmul.mubr.bf16.gmra.mrb[0].mxu0 %v350
    %v477 = vpop.f32.mrb[0].mxu0
    %v478 = vadd.f32 0.0, %v477
    %v479 = vpop.f32.mrb[0].mxu0
    %v480 = vpop.f32.mrb[0].mxu0
    %v481 = vadd.f32 0.0, %v480
    %v482 = vpop.f32.mrb[0].mxu0
    %483 = vmatprep.mubr.bf16.mxu0 0
    %484 = vmatmul.mubr.bf16.gmra.mrb[0].mxu0 %v351
    %v485 = vpop.f32.mrb[0].mxu0
    %v486 = vadd.f32 0.0, %v485
    %v487 = vpop.f32.mrb[0].mxu0
    %v488 = vpop.f32.mrb[0].mxu0
    %v489 = vadd.f32 0.0, %v488
    %v490 = vpop.f32.mrb[0].mxu0
    %491 = vmatprep.mubr.bf16.mxu0 0
    %492 = vmatmul.mubr.bf16.gmra.mrb[0].mxu0 %v352
    %v493 = vpop.f32.mrb[0].mxu0
    %v494 = vadd.f32 0.0, %v493
    %v495 = vpop.f32.mrb[0].mxu0
    %v496 = vpop.f32.mrb[0].mxu0
    %v497 = vadd.f32 0.0, %v496
    %v498 = vpop.f32.mrb[0].mxu0
    %499 = vmatprep.mubr.bf16.mxu0 0
    %500 = vmatmul.mubr.bf16.gmra.mrb[0].mxu0 %v353
    %v501 = vpop.f32.mrb[0].mxu0
    %v502 = vadd.f32 0.0, %v501
    %v503 = vpop.f32.mrb[0].mxu0
    %v504 = vpop.f32.mrb[0].mxu0
    %v505 = vadd.f32 0.0, %v504
    %v506 = vpop.f32.mrb[0].mxu0
    %507 = vmatprep.mubr.bf16.mxu0 0
    %508 = vmatmul.mubr.bf16.gmra.mrb[0].mxu0 %v354
    %v509 = vpop.f32.mrb[0].mxu0
    %v510 = vadd.f32 0.0, %v509
    %v511 = vpop.f32.mrb[0].mxu0
    %v512 = vpop.f32.mrb[0].mxu0
    %v513 = vadd.f32 0.0, %v512
    %v514 = vpop.f32.mrb[0].mxu0
    %515 = vdwg.mxu0
    %v516 = vadd.f32 %v331, %v454
    %v517 = vadd.f32 %v332, %v457
    %v518 = vadd.f32 %v333, %v462
    %v519 = vadd.f32 %v334, %v465
    %v520 = vadd.f32 %v335, %v470
    %v521 = vadd.f32 %v336, %v473
    %v522 = vadd.f32 %v337, %v478
    %v523 = vadd.f32 %v338, %v481
    %v524 = vadd.f32 %v339, %v486
    %v525 = vadd.f32 %v340, %v489
    %v526 = vadd.f32 %v341, %v494
    %v527 = vadd.f32 %v342, %v497
    %v528 = vadd.f32 %v343, %v502
    %v529 = vadd.f32 %v344, %v505
    %v530 = vadd.f32 %v345, %v510
    %v531 = vadd.f32 %v346, %v513
    %532 = vst [vmem:[#allocation2] sm:$0xff] %v516
    %533 = vst [vmem:[#allocation2 + $0x8] sm:$0xff] %v517
    %534 = vst [vmem:[#allocation2 + $0x10] sm:$0xff] %v518
    %535 = vst [vmem:[#allocation2 + $0x18] sm:$0xff] %v519
    %536 = vst [vmem:[#allocation2 + $0x20] sm:$0xff] %v520
    %537 = vst [vmem:[#allocation2 + $0x28] sm:$0xff] %v521
    %538 = vst [vmem:[#allocation2 + $0x30] sm:$0xff] %v522
    %539 = vst [vmem:[#allocation2 + $0x38] sm:$0xff] %v523
    %540 = vst [vmem:[#allocation2 + $0x40] sm:$0xff] %v524
    %541 = vst [vmem:[#allocation2 + $0x48] sm:$0xff] %v525
    %542 = vst [vmem:[#allocation2 + $0x50] sm:$0xff] %v526
    %543 = vst [vmem:[#allocation2 + $0x58] sm:$0xff] %v527
    %544 = vst [vmem:[#allocation2 + $0x60] sm:$0xff] %v528
    %545 = vst [vmem:[#allocation2 + $0x68] sm:$0xff] %v529
    %546 = vst [vmem:[#allocation2 + $0x70] sm:$0xff] %v530
    %547 = vst [vmem:[#allocation2 + $0x78] sm:$0xff] %v531
    // Predicated region
    $region38: #{tpu_custom_call.1} parent=1 // pred_check
      %p548 = pneg %p63
    $region39: #{tpu_custom_call.1} parent=1 // pred_check_branch
      %550 = sbr.rel (%p548) target = $region41
    $region40: #{tpu_custom_call.1} parent=1 // pred_region
      %v551 = vld [vmem:[#allocation2] sm:$0xff]
      %v552 = vld [vmem:[#allocation2 + $0x8] sm:$0xff]
      %v553 = vld [vmem:[#allocation2 + $0x10] sm:$0xff]
      %v554 = vld [vmem:[#allocation2 + $0x18] sm:$0xff]
      %v555 = vld [vmem:[#allocation2 + $0x20] sm:$0xff]
      %v556 = vld [vmem:[#allocation2 + $0x28] sm:$0xff]
      %v557 = vld [vmem:[#allocation2 + $0x30] sm:$0xff]
      %v558 = vld [vmem:[#allocation2 + $0x38] sm:$0xff]
      %v559 = vld [vmem:[#allocation2 + $0x40] sm:$0xff]
      %v560 = vld [vmem:[#allocation2 + $0x48] sm:$0xff]
      %v561 = vld [vmem:[#allocation2 + $0x50] sm:$0xff]
      %v562 = vld [vmem:[#allocation2 + $0x58] sm:$0xff]
      %v563 = vld [vmem:[#allocation2 + $0x60] sm:$0xff]
      %v564 = vld [vmem:[#allocation2 + $0x68] sm:$0xff]
      %v565 = vld [vmem:[#allocation2 + $0x70] sm:$0xff]
      %v566 = vld [vmem:[#allocation2 + $0x78] sm:$0xff]
      %v567 = vld [vmem:[%s4] sm:$0x1]
      %v569 = vlaneseq
      %v570 = vshrl.u32 %v569, 7
      %v571 = vsub.s32 0, %v570
      %v572 = vrot.slane %v567, %v571
      %v574 = vadd.f32 %v551, %v572
      %v575 = vadd.f32 %v552, %v572
      %v576 = vadd.f32 %v553, %v572
      %v577 = vadd.f32 %v554, %v572
      %v578 = vadd.f32 %v555, %v572
      %v579 = vadd.f32 %v556, %v572
      %v580 = vadd.f32 %v557, %v572
      %v581 = vadd.f32 %v558, %v572
      %v582 = vadd.f32 %v559, %v572
      %v583 = vadd.f32 %v560, %v572
      %v584 = vadd.f32 %v561, %v572
      %v585 = vadd.f32 %v562, %v572
      %v586 = vadd.f32 %v563, %v572
      %v587 = vadd.f32 %v564, %v572
      %v588 = vadd.f32 %v565, %v572
      %v589 = vadd.f32 %v566, %v572
      %590 = vst [vmem:[#allocation9] sm:$0xff] %v574
      %591 = vst [vmem:[#allocation9 + $0x8] sm:$0xff] %v575
      %592 = vst [vmem:[#allocation9 + $0x10] sm:$0xff] %v576
      %593 = vst [vmem:[#allocation9 + $0x18] sm:$0xff] %v577
      %594 = vst [vmem:[#allocation9 + $0x20] sm:$0xff] %v578
      %595 = vst [vmem:[#allocation9 + $0x28] sm:$0xff] %v579
      %596 = vst [vmem:[#allocation9 + $0x30] sm:$0xff] %v580
      %597 = vst [vmem:[#allocation9 + $0x38] sm:$0xff] %v581
      %598 = vst [vmem:[#allocation9 + $0x40] sm:$0xff] %v582
      %599 = vst [vmem:[#allocation9 + $0x48] sm:$0xff] %v583
      %600 = vst [vmem:[#allocation9 + $0x50] sm:$0xff] %v584
      %601 = vst [vmem:[#allocation9 + $0x58] sm:$0xff] %v585
      %602 = vst [vmem:[#allocation9 + $0x60] sm:$0xff] %v586
      %603 = vst [vmem:[#allocation9 + $0x68] sm:$0xff] %v587
      %604 = vst [vmem:[#allocation9 + $0x70] sm:$0xff] %v588
      %605 = vst [vmem:[#allocation9 + $0x78] sm:$0xff] %v589
    $region41: #{tpu_custom_call.1} parent=1 // pred_fallthru
      _
    // Predicated region
    $region42: #{tpu_custom_call.1} parent=1 // pred_check
      _
    $region43: #{tpu_custom_call.1} parent=1 // pred_check_branch
      %607 = sbr.rel (0) target = $region45
    $region44: #{tpu_custom_call.1} parent=1 // pred_region
      %s609 = ssub.s32 2048, 2048
      %610 = vsyncadd [#allocation5], %s609
      %s611 = sshll.u32 [#allocation9], 4
      %s612 = int_to_ptr.vmem [resolvable:$true] %s611
      %617 = dma.vmem_to_hbm [thread:$0]  %s612, 2048, %s5, [#allocation5], 128, 128, 8
    $region45: #{tpu_custom_call.1} parent=1 // pred_fallthru
      _
    // Predicated region
    $region46: #{tpu_custom_call.1} parent=1 // pred_check
      _
    $region47: #{tpu_custom_call.1} parent=1 // pred_check_branch
      %619 = sbr.rel (0) target = $region49
    $region48: #{tpu_custom_call.1} parent=1 // pred_region
      %620 = dma.done [#allocation5], 2048
    $region49: #{tpu_custom_call.1} parent=1 // pred_fallthru
      _
    %621 = vsyncpa [#allocation4], 1
    %622 = vsyncpa [#allocation7], 1
    %623 = vsyncpa [#allocation5], 1

</llo_original>
